<compile_context>
chip_gen: v7x
topology: tpu7x:2x2x1
jax: 0.10.0
libtpu: 0.0.40
codegen_flags: <defaults>
</compile_context>

<pallas_src>
import functools

import jax
import jax.numpy as jnp
from jax.experimental import pallas as pl
from jax.experimental.pallas import tpu as pltpu

GAMMA = 1.5
ALPHA = 0.25

_LANES = 128
_SUBLANES = 8
_VREG_ELEMS = _LANES * _SUBLANES  # 1024


def _round_up(x, m):
    return ((x + m - 1) // m) * m


def _modulating_factor(t, gamma):
    """(1 - p_t) ** gamma with cheap static special cases (t already >= 0)."""
    if gamma == 0.0:
        return jnp.ones_like(t)
    if gamma == 0.5:
        return jnp.sqrt(t)
    if gamma == 1.0:
        return t
    if gamma == 1.5:
        return t * jnp.sqrt(t)      # exact replacement; sqrt uses the EUP slot
    if gamma == 2.0:
        return t * t                # pure VALU
    # Generic pow = exp(gamma*log(t)); guard t == 0 against log(0) -> -inf*0.
    safe = jnp.exp(gamma * jnp.log(jnp.maximum(t, 1e-30)))
    return jnp.where(t > 0.0, safe, 0.0)


def _focal_loss_kernel(pred_ref, true_ref, partial_ref, *, gamma, alpha,
                       n_valid, needs_mask):
    x = pred_ref[...].astype(jnp.float32)
    y = true_ref[...].astype(jnp.float32)

    # exp(-|x|) is reused for the stable BCE log-term AND for sigmoid, so only
    # one exp per element hits the EUP.
    e = jnp.exp(-jnp.abs(x))

    # BCEWithLogitsLoss (reduction='none'), numerically stable form:
    #   max(x, 0) - x*y + log(1 + exp(-|x|))
    bce = jnp.maximum(x, 0.0) - x * y + jnp.log1p(e)

    # sigmoid(x) from e:  x >= 0 -> 1/(1+e),  x < 0 -> e/(1+e).
    # Exact divide: same single EUP vrcp, refinement rides the VALU slack.
    inv_1pe = 1.0 / (1.0 + e)
    pred_prob = jnp.where(x >= 0.0, inv_1pe, e * inv_1pe)

    p_t = y * pred_prob + (1.0 - y) * (1.0 - pred_prob)
    alpha_factor = y * alpha + (1.0 - y) * (1.0 - alpha)
    # Clamp: rounding (or soft labels) can push p_t marginally above 1.0,
    # which would make sqrt(1 - p_t) NaN and poison the mean.  One free VALU op.
    t = jnp.maximum(1.0 - p_t, 0.0)

    loss = bce * alpha_factor * _modulating_factor(t, gamma)

    rt, lanes = loss.shape
    if needs_mask:
        # Zero out wrapper padding and garbage rows of an overhanging last
        # block: element (r, c) of grid step i has flat index
        # (i*row_tile + r)*lanes + c; keep only indices < n_valid.
        row_idx = jax.lax.broadcasted_iota(jnp.int32, (rt, lanes), 0)
        col_idx = jax.lax.broadcasted_iota(jnp.int32, (rt, lanes), 1)
        flat_idx = (pl.program_id(0) * rt + row_idx) * lanes + col_idx
        loss = jnp.where(flat_idx < n_valid, loss, 0.0)

    # Reduce this tile to an (8, 128) vreg-shaped partial sum with pure VPU
    # adds (the sublane-group reshape is a no-move re-indexing of vregs).
    partial_ref[...] = jnp.sum(
        loss.reshape(rt // _SUBLANES, _SUBLANES, lanes), axis=0)


def _focal_loss_elementwise_ref(pred, true, gamma, alpha):
    """Pure-JAX elementwise focal loss (used for tiny inputs / 'none' / tests)."""
    x = pred.astype(jnp.float32)
    y = true.astype(jnp.float32)
    bce = jnp.maximum(x, 0.0) - x * y + jnp.log1p(jnp.exp(-jnp.abs(x)))
    p = jax.nn.sigmoid(x)
    p_t = y * p + (1.0 - y) * (1.0 - p)
    af = y * alpha + (1.0 - y) * (1.0 - alpha)
    mf = jnp.maximum(1.0 - p_t, 0.0) ** gamma
    return bce * af * mf


def _focal_loss_sum_pallas(pred, true, gamma, alpha, *, max_row_tile):
    n_total = pred.size
    flat_p = pred.reshape(-1)
    flat_t = true.reshape(-1)

    # Lane-dense (rows, 128) slab.  Only pad when numel is not a multiple of
    # 8*128 (pad <= 1023 elems); the common case is a free reshape, no HBM
    # copy.  Padded / overhanging elements are masked inside the kernel.
    padded = _round_up(n_total, _VREG_ELEMS)
    if padded != n_total:
        flat_p = jnp.pad(flat_p, (0, padded - n_total))
        flat_t = jnp.pad(flat_t, (0, padded - n_total))
    rows = padded // _LANES
    pred2d = flat_p.reshape(rows, _LANES)
    true2d = flat_t.reshape(rows, _LANES)

    # Balanced tiling: never round rows up to a whole extra max tile, and use
    # at least 2 grid steps (when possible) so the "parallel" axis can shard
    # across v7x's two TensorCores.
    num_tiles = pl.cdiv(rows, max_row_tile)
    if rows >= 2 * _SUBLANES:
        num_tiles = max(num_tiles, 2)
    row_tile = _round_up(pl.cdiv(rows, num_tiles), _SUBLANES)
    num_tiles = pl.cdiv(rows, row_tile)

    # Mask only when the wrapper padded or the last block overhangs the array.
    needs_mask = (rows * _LANES != n_total) or (rows % row_tile != 0)

    kernel = functools.partial(_focal_loss_kernel, gamma=gamma, alpha=alpha,
                               n_valid=n_total, needs_mask=needs_mask)

    partials = pl.pallas_call(
        kernel,
        out_shape=jax.ShapeDtypeStruct((num_tiles * _SUBLANES, _LANES),
                                       jnp.float32),
        grid_spec=pltpu.PrefetchScalarGridSpec(
            num_scalar_prefetch=0,
            grid=(num_tiles,),
            in_specs=[
                pl.BlockSpec((row_tile, _LANES), lambda i: (i, 0)),
                pl.BlockSpec((row_tile, _LANES), lambda i: (i, 0)),
            ],
            out_specs=pl.BlockSpec((_SUBLANES, _LANES), lambda i: (i, 0)),
        ),
        compiler_params=pltpu.CompilerParams(
            dimension_semantics=("parallel",),
            # Budget: 2 inputs x 2 buffers x (row_tile,128) blocks plus ~10
            # full-tile f32 elementwise temporaries in the body.  48 MiB keeps
            # headroom on every generation (v7x physical VMEM is 64 MiB).
            vmem_limit_bytes=48 * 1024 * 1024,
        ),
    )(pred2d, true2d)

    return jnp.sum(partials)


def focal_loss(pred, true, gamma=GAMMA, alpha=ALPHA, *, reduction="mean",
               max_row_tile=4096, min_pallas_elems=8192):
    """Focal loss on top of BCEWithLogitsLoss; reduction in {'mean','sum','none'}."""
    assert pred.shape == true.shape
    n_total = pred.size

    if reduction == "none":
        # TODO(synk): no dedicated Pallas kernel for the elementwise output;
        # the fused-XLA elementwise path keeps the module's 'none' semantics.
        return _focal_loss_elementwise_ref(pred, true, gamma, alpha)

    if n_total < min_pallas_elems:
        # Tiny inputs: pallas_call launch + grid machinery dominates; let XLA
        # fuse the elementwise + reduce instead.
        total = jnp.sum(_focal_loss_elementwise_ref(pred, true, gamma, alpha))
    else:
        total = _focal_loss_sum_pallas(pred, true, gamma, alpha,
                                       max_row_tile=max_row_tile)

    if reduction == "mean":
        return total / jnp.float32(n_total)
    elif reduction == "sum":
        return total
    raise ValueError(f"unsupported reduction: {reduction}")


def _ref_mean(pred, true, gamma=GAMMA, alpha=ALPHA):
    return jnp.mean(_focal_loss_elementwise_ref(pred, true, gamma, alpha))


if __name__ == "__main__":
    key = jax.random.PRNGKey(0)
    ks = jax.random.split(key, 8)

    # 1) Shipped NCHW shape, f32, forced through the Pallas path
    #    (2048 elems -> 2 grid steps of (8,128) blocks, no masking needed).
    pred = jax.random.normal(ks[0], (2, 4, 16, 16), dtype=jnp.float32)
    true = (jax.random.uniform(ks[1], (2, 4, 16, 16)) > 0.5).astype(jnp.float32)
    out = jax.block_until_ready(focal_loss(pred, true, min_pallas_elems=0))
    ref = _ref_mean(pred, true)
    assert jnp.allclose(out, ref, rtol=1e-4, atol=1e-6), (out, ref)

    # 2) Ragged numel (1155, not a multiple of 1024) -> small pad + in-kernel mask.
    pred = jax.random.normal(ks[2], (3, 5, 7, 11), dtype=jnp.float32)
    true = (jax.random.uniform(ks[3], (3, 5, 7, 11)) > 0.5).astype(jnp.float32)
    out = jax.block_until_ready(focal_loss(pred, true, min_pallas_elems=0))
    ref = _ref_mean(pred, true)
    assert jnp.allclose(out, ref, rtol=1e-4, atol=1e-6), (out, ref)

    # 3) bf16 inputs, multi-tile with an overhanging last block
    #    (104 rows, 56-row tiles) -> exercises garbage-row masking.
    pred = jax.random.normal(ks[4], (2, 3, 33, 65), dtype=jnp.bfloat16)
    true = (jax.random.uniform(ks[5], (2, 3, 33, 65)) > 0.5).astype(jnp.bfloat16)
    out = jax.block_until_ready(focal_loss(pred, true, min_pallas_elems=0))
    ref = _ref_mean(pred, true)
    assert jnp.allclose(out, ref, rtol=1e-4, atol=1e-6), (out, ref)

    # 4) 'sum' reduction via the default small-input bypass (fused-XLA path).
    pred = jax.random.normal(ks[6], (2, 4, 16, 16), dtype=jnp.float32)
    true = (jax.random.uniform(ks[7], (2, 4, 16, 16)) > 0.5).astype(jnp.float32)
    out = jax.block_until_ready(focal_loss(pred, true, reduction="sum"))
    ref = jnp.sum(_focal_loss_elementwise_ref(pred, true, GAMMA, ALPHA))
    assert jnp.allclose(out, ref, rtol=1e-4, atol=1e-6), (out, ref)

    print("KERNEL_OK")
</pallas_src>

<mosaic_0001>
module attributes {stable_mosaic.version = 11 : i64} {
  func.func @_focal_loss_kernel(%arg0: i32, %arg1: memref<8x128xf32, #tpu.memory_space<vmem>>, %arg2: memref<8x128xf32, #tpu.memory_space<vmem>>, %arg3: memref<8x128xf32, #tpu.memory_space<vmem>>) attributes {dimension_semantics = [#tpu.dimension_semantics<parallel>], iteration_bounds = array<i64: 2>, scalar_prefetch = 0 : i64, scratch_operands = 0 : i64, tpu.core_type = #tpu.core_type<tc>, window_params = [{transform_indices = @transform_0, window_bounds = array<i64: 8, 128>}, {transform_indices = @transform_1, window_bounds = array<i64: 8, 128>}, {transform_indices = @transform_2, window_bounds = array<i64: 8, 128>}]} {
    %c0 = arith.constant 0 : index
    %c0_0 = arith.constant 0 : index
    %0 = vector.load %arg1[%c0, %c0_0] : memref<8x128xf32, #tpu.memory_space<vmem>>, vector<8x128xf32>
    %c0_1 = arith.constant 0 : index
    %c0_2 = arith.constant 0 : index
    %1 = vector.load %arg2[%c0_1, %c0_2] : memref<8x128xf32, #tpu.memory_space<vmem>>, vector<8x128xf32>
    %2 = math.absf %0 : vector<8x128xf32>
    %cst = arith.constant 0.000000e+00 : f32
    %3 = vector.broadcast %cst : f32 to vector<8x128xf32>
    %4 = arith.subf %3, %2 : vector<8x128xf32>
    %5 = math.exp %4 : vector<8x128xf32>
    %cst_3 = arith.constant 0.000000e+00 : f32
    %6 = vector.broadcast %cst_3 : f32 to vector<8x128xf32>
    %7 = arith.maximumf %0, %6 : vector<8x128xf32>
    %8 = arith.mulf %0, %1 : vector<8x128xf32>
    %9 = arith.subf %7, %8 : vector<8x128xf32>
    %10 = math.log1p %5 : vector<8x128xf32>
    %11 = arith.addf %9, %10 : vector<8x128xf32>
    %cst_4 = arith.constant 1.000000e+00 : f32
    %12 = vector.broadcast %cst_4 : f32 to vector<8x128xf32>
    %13 = arith.addf %12, %5 : vector<8x128xf32>
    %cst_5 = arith.constant 1.000000e+00 : f32
    %14 = vector.broadcast %cst_5 : f32 to vector<8x128xf32>
    %15 = arith.divf %14, %13 : vector<8x128xf32>
    %cst_6 = arith.constant 0.000000e+00 : f32
    %16 = vector.broadcast %cst_6 : f32 to vector<8x128xf32>
    %17 = arith.cmpf oge, %0, %16 : vector<8x128xf32>
    %18 = arith.mulf %5, %15 : vector<8x128xf32>
    %19 = arith.select %17, %15, %18 : vector<8x128xi1>, vector<8x128xf32>
    %20 = arith.mulf %1, %19 : vector<8x128xf32>
    %cst_7 = arith.constant 1.000000e+00 : f32
    %21 = vector.broadcast %cst_7 : f32 to vector<8x128xf32>
    %22 = arith.subf %21, %1 : vector<8x128xf32>
    %cst_8 = arith.constant 1.000000e+00 : f32
    %23 = vector.broadcast %cst_8 : f32 to vector<8x128xf32>
    %24 = arith.subf %23, %19 : vector<8x128xf32>
    %25 = arith.mulf %22, %24 : vector<8x128xf32>
    %26 = arith.addf %20, %25 : vector<8x128xf32>
    %cst_9 = arith.constant 2.500000e-01 : f32
    %27 = vector.broadcast %cst_9 : f32 to vector<8x128xf32>
    %28 = arith.mulf %1, %27 : vector<8x128xf32>
    %cst_10 = arith.constant 1.000000e+00 : f32
    %29 = vector.broadcast %cst_10 : f32 to vector<8x128xf32>
    %30 = arith.subf %29, %1 : vector<8x128xf32>
    %cst_11 = arith.constant 7.500000e-01 : f32
    %31 = vector.broadcast %cst_11 : f32 to vector<8x128xf32>
    %32 = arith.mulf %30, %31 : vector<8x128xf32>
    %33 = arith.addf %28, %32 : vector<8x128xf32>
    %cst_12 = arith.constant 1.000000e+00 : f32
    %34 = vector.broadcast %cst_12 : f32 to vector<8x128xf32>
    %35 = arith.subf %34, %26 : vector<8x128xf32>
    %cst_13 = arith.constant 0.000000e+00 : f32
    %36 = vector.broadcast %cst_13 : f32 to vector<8x128xf32>
    %37 = arith.maximumf %35, %36 : vector<8x128xf32>
    %38 = arith.mulf %11, %33 : vector<8x128xf32>
    %39 = math.sqrt %37 : vector<8x128xf32>
    %40 = arith.mulf %37, %39 : vector<8x128xf32>
    %41 = arith.mulf %38, %40 : vector<8x128xf32>
    %42 = vector.shape_cast %41 : vector<8x128xf32> to vector<1x8x128xf32>
    %cst_14 = arith.constant dense<0.000000e+00> : vector<8x128xf32>
    %43 = vector.multi_reduction <add>, %42, %cst_14 [0] : vector<1x8x128xf32> to vector<8x128xf32>
    %c0_15 = arith.constant 0 : index
    %c0_16 = arith.constant 0 : index
    %44 = vector.load %arg3[%c0_15, %c0_16] : memref<8x128xf32, #tpu.memory_space<vmem>>, vector<8x128xf32>
    tpu.vector_store %arg3[%c0_15, %c0_16], %43 {strides = array<i32>} : memref<8x128xf32, #tpu.memory_space<vmem>>, vector<8x128xf32>,
    return
  }
  func.func @transform_0(%arg0: i32) -> (i32, i32) {
    %c0_i32 = arith.constant 0 : i32
    %c0_i32_0 = arith.constant 0 : i32
    return %arg0, %c0_i32 : i32, i32
  }
  func.func @transform_1(%arg0: i32) -> (i32, i32) {
    %c0_i32 = arith.constant 0 : i32
    %c0_i32_0 = arith.constant 0 : i32
    return %arg0, %c0_i32 : i32, i32
  }
  func.func @transform_2(%arg0: i32) -> (i32, i32) {
    %c0_i32 = arith.constant 0 : i32
    %c0_i32_0 = arith.constant 0 : i32
    return %arg0, %c0_i32 : i32, i32
  }
}

</mosaic_0001>

<llo_original>
// kernel: tpu_custom_call.1
$region0: #{tpu_custom_call.1}
  #allocation0 [shape = 'u32[]', space=smem, size = 0x4, offset = 0x4, fixed_abs, tag = 'smem constant byte address 0x4 - core index']
  #allocation1 [shape = 'u32[144,128]{1,0:T(1,128)}', space=vmem, size = 0x12000, scoped, tag = 'internal scratch']
  %s0 = inlined_call_operand.hbm [shape: f32[16,128], index: 0, kind: input, shape index: {}]
  %s1 = inlined_call_operand.hbm [shape: f32[16,128], index: 1, kind: input, shape index: {}]
  %s2 = inlined_call_operand.hbm [shape: f32[16,128], index: 2, kind: output, shape index: {}]
  %s3 = sld [smem:[#allocation0]]
  $region49: #{tpu_custom_call.1} parent=0
    _
  %s5 = ssub.s32 1, %s3
  %s6 = scalar_select 0, %s5, %s3
  $region1: #{tpu_custom_call.1} parent=0
    #allocation2 [shape = 'u8[8192]{0}', space=vmem, size = 0x2000, scoped, tag = 'input window, operand 0']
    #allocation3 [shape = 's32[2]{0}', space=sflag, size = 0x8, scoped, tag = 'scoped memory for tpu_custom_call.1']
    #allocation4 [shape = 's32[2]{0}', space=sflag, size = 0x8, scoped, tag = 'scoped memory for tpu_custom_call.1']
    #allocation5 [shape = 'u8[8192]{0}', space=vmem, size = 0x2000, scoped, tag = 'input window, operand 1']
    #allocation6 [shape = 's32[2]{0}', space=sflag, size = 0x8, scoped, tag = 'scoped memory for tpu_custom_call.1']
    #allocation7 [shape = 'u8[8192]{0}', space=vmem, size = 0x2000, scoped, tag = 'output window, operand 0']
    %7 = vsyncpa [#allocation3], 0
    %s8 = scalar_lea.sflag [#allocation3], 1
    %9 = vsyncpa %s8, 0
    %10 = vsyncpa [#allocation6], 0
    %s11 = scalar_lea.sflag [#allocation6], 1
    %12 = vsyncpa %s11, 0
    %13 = vsyncpa [#allocation4], 0
    %s14 = scalar_lea.sflag [#allocation4], 1
    %15 = vsyncpa %s14, 0
    loop: start=0, step=1, limit=4
    $region2: #{tpu_custom_call.1} parent=1 // loop_pre_header
      _
    $region3: #{tpu_custom_call.1} parent=1 // loop_header
      %s17 = sphi 0, %s21
      %p18 = scmp.ge.s32.totalorder %s17, 4
      %s27 = sphi 0, %s29
      %s30 = sphi 0, %s27
      %s31 = sphi 0, %s30
      %s47 = sphi 0, %s31
      %s53 = sphi 0, %s55
      %s56 = sphi 0, %s53
      %s57 = sphi 0, %s56
      %s73 = sphi 0, %s57
      %s79 = sphi 0, %s81
      %s82 = sphi 0, %s79
      %s83 = sphi 0, %s82
      %s99 = sphi 0, %s83
    $region4: #{tpu_custom_call.1} parent=1 // loop_header_branch
      %20 = sbr.rel (%p18) target = $region8
    $region5: #{tpu_custom_call.1} parent=1 // loop_body
      %s22 = ssub.s32 %s17, 1
      %s23 = ssub.s32 %s17, 2
      %s24 = sadd.s32 %s17, 1
      %s25 = ssub.s32 %s17, %s24
      %p26 = scmp.eq.s32.totalorder %s25, 0
      %s28 = sadd.s32 %s27, 1
      %s29 = scalar_select %p26, %s27, %s28
      %p32 = pneg %p26
      %p33 = scmp.eq.s32.totalorder %s17, 1
      %p34 = por %p32, %p33
      %p35 = scmp.ne.s32.totalorder %s27, %s30
      %p36 = scmp.eq.s32.totalorder %s17, 0
      %p37 = por %p35, %p36
      %p38 = scmp.ne.s32.totalorder %s27, %s30
      %p39 = scmp.eq.s32.totalorder %s22, 1
      %p40 = por %p38, %p39
      %p41 = scmp.ne.s32.totalorder %s30, %s31
      %p42 = scmp.eq.s32.totalorder %s22, 0
      %p43 = por %p41, %p42
      %p44 = scmp.ne.s32.totalorder %s30, %s31
      %p45 = scmp.eq.s32.totalorder %s23, 1
      %p46 = por %p44, %p45
      %p48 = scmp.ne.s32.totalorder %s31, %s47
      %p49 = scmp.eq.s32.totalorder %s23, 0
      %p50 = por %p48, %p49
      %s51 = ssub.s32 %s17, %s24
      %p52 = scmp.eq.s32.totalorder %s51, 0
      %s54 = sadd.s32 %s53, 1
      %s55 = scalar_select %p52, %s53, %s54
      %p58 = pneg %p52
      %p59 = scmp.eq.s32.totalorder %s17, 1
      %p60 = por %p58, %p59
      %p61 = scmp.ne.s32.totalorder %s53, %s56
      %p62 = scmp.eq.s32.totalorder %s17, 0
      %p63 = por %p61, %p62
      %p64 = scmp.ne.s32.totalorder %s53, %s56
      %p65 = scmp.eq.s32.totalorder %s22, 1
      %p66 = por %p64, %p65
      %p67 = scmp.ne.s32.totalorder %s56, %s57
      %p68 = scmp.eq.s32.totalorder %s22, 0
      %p69 = por %p67, %p68
      %p70 = scmp.ne.s32.totalorder %s56, %s57
      %p71 = scmp.eq.s32.totalorder %s23, 1
      %p72 = por %p70, %p71
      %p74 = scmp.ne.s32.totalorder %s57, %s73
      %p75 = scmp.eq.s32.totalorder %s23, 0
      %p76 = por %p74, %p75
      %s77 = ssub.s32 %s17, %s24
      %p78 = scmp.eq.s32.totalorder %s77, 0
      %s80 = sadd.s32 %s79, 1
      %s81 = scalar_select %p78, %s79, %s80
      %p84 = pneg %p78
      %p85 = scmp.eq.s32.totalorder %s17, 1
      %p86 = por %p84, %p85
      %p87 = scmp.ne.s32.totalorder %s79, %s82
      %p88 = scmp.eq.s32.totalorder %s17, 0
      %p89 = por %p87, %p88
      %p90 = scmp.ne.s32.totalorder %s79, %s82
      %p91 = scmp.eq.s32.totalorder %s22, 1
      %p92 = por %p90, %p91
      %p93 = scmp.ne.s32.totalorder %s82, %s83
      %p94 = scmp.eq.s32.totalorder %s22, 0
      %p95 = por %p93, %p94
      %p96 = scmp.ne.s32.totalorder %s82, %s83
      %p97 = scmp.eq.s32.totalorder %s23, 1
      %p98 = por %p96, %p97
      %p100 = scmp.ne.s32.totalorder %s83, %s99
      %p101 = scmp.eq.s32.totalorder %s23, 0
      %p102 = por %p100, %p101
      %p103 = scmp.le.s32.totalorder 1, %s17
      %p104 = scmp.lt.s32.totalorder %s17, 3
      %p105 = pnand %p103, %p104
      %p106 = pneg %p105
      // Predicated region
      $region9: #{tpu_custom_call.1} parent=5 // pred_check
        _
      $region10: #{tpu_custom_call.1} parent=5 // pred_check_branch
        %108 = sbr.rel (%p105) target = $region12
      $region11: #{tpu_custom_call.1} parent=5 // pred_region
        %s109 = ssub.s32 %s17, 1
      $region12: #{tpu_custom_call.1} parent=5 // pred_fallthru
        _
      %p110 = scmp.lt.s32.totalorder %s17, 2
      // Predicated region
      $region13: #{tpu_custom_call.1} parent=5 // pred_check
        %p111 = pneg %p110
      $region14: #{tpu_custom_call.1} parent=5 // pred_check_branch
        %113 = sbr.rel (%p111) target = $region16
      $region15: #{tpu_custom_call.1} parent=5 // pred_region
        // Predicated region
        $region17: #{tpu_custom_call.1} parent=15 // pred_check
          %p114 = pneg %p37
        $region18: #{tpu_custom_call.1} parent=15 // pred_check_branch
          %116 = sbr.rel (%p114) target = $region20
        $region19: #{tpu_custom_call.1} parent=15 // pred_region
          %s117 = sand.u32 %s27, 1
          %s118 = scalar_lea.sflag [#allocation3], %s117
          %s119 = sand.u32 %s27, 1
          %s120 = smul.addr %s119, 8
          %s121 = scalar_lea.vmem [#allocation2], %s120
          %s123 = ssub.s32 128, 128
          %124 = vsyncadd %s118, %s123
          %s125 = smul.addr %s17, 128
          %s126 = scalar_lea.hbm %s0, %s125
          %s128 = sshll.u32 %s121, 4
          %s129 = int_to_ptr.vmem [resolvable:$true] %s128
          %131 = dma.hbm_to_vmem [thread:$0]  %s126, 128, %s129, %s118
        $region20: #{tpu_custom_call.1} parent=15 // pred_fallthru
          _
        // Predicated region
        $region21: #{tpu_custom_call.1} parent=15 // pred_check
          %p132 = pneg %p63
        $region22: #{tpu_custom_call.1} parent=15 // pred_check_branch
          %134 = sbr.rel (%p132) target = $region24
        $region23: #{tpu_custom_call.1} parent=15 // pred_region
          %s135 = sand.u32 %s53, 1
          %s136 = scalar_lea.sflag [#allocation6], %s135
          %s137 = sand.u32 %s53, 1
          %s138 = smul.addr %s137, 8
          %s139 = scalar_lea.vmem [#allocation5], %s138
          %s141 = ssub.s32 128, 128
          %142 = vsyncadd %s136, %s141
          %s143 = smul.addr %s17, 128
          %s144 = scalar_lea.hbm %s1, %s143
          %s146 = sshll.u32 %s139, 4
          %s147 = int_to_ptr.vmem [resolvable:$true] %s146
          %149 = dma.hbm_to_vmem [thread:$0]  %s144, 128, %s147, %s136
        $region24: #{tpu_custom_call.1} parent=15 // pred_fallthru
          _
      $region16: #{tpu_custom_call.1} parent=5 // pred_fallthru
        _
      %p150 = scmp.le.s32.totalorder 1, %s17
      %p151 = scmp.lt.s32.totalorder %s17, 3
      %p152 = pnand %p150, %p151
      %p153 = pneg %p152
      // Predicated region
      $region25: #{tpu_custom_call.1} parent=5 // pred_check
        _
      $region26: #{tpu_custom_call.1} parent=5 // pred_check_branch
        %155 = sbr.rel (%p152) target = $region28
      $region27: #{tpu_custom_call.1} parent=5 // pred_region
        %s156 = ssub.s32 %s17, 1
        %s157 = sand.u32 %s30, 1
        %s158 = scalar_lea.sflag [#allocation3], %s157
        %s159 = sand.u32 %s30, 1
        %s160 = smul.addr %s159, 8
        %s161 = scalar_lea.vmem [#allocation2], %s160
        // Predicated region
        $region29: #{tpu_custom_call.1} parent=27 // pred_check
          %p162 = pneg %p43
        $region30: #{tpu_custom_call.1} parent=27 // pred_check_branch
          %164 = sbr.rel (%p162) target = $region32
        $region31: #{tpu_custom_call.1} parent=27 // pred_region
          %165 = dma.done %s158, 128
        $region32: #{tpu_custom_call.1} parent=27 // pred_fallthru
          _
        %s166 = sand.u32 %s56, 1
        %s167 = scalar_lea.sflag [#allocation6], %s166
        %s168 = sand.u32 %s56, 1
        %s169 = smul.addr %s168, 8
        %s170 = scalar_lea.vmem [#allocation5], %s169
        // Predicated region
        $region33: #{tpu_custom_call.1} parent=27 // pred_check
          %p171 = pneg %p69
        $region34: #{tpu_custom_call.1} parent=27 // pred_check_branch
          %173 = sbr.rel (%p171) target = $region36
        $region35: #{tpu_custom_call.1} parent=27 // pred_region
          %174 = dma.done %s167, 128
        $region36: #{tpu_custom_call.1} parent=27 // pred_fallthru
          _
        %s175 = sand.u32 %s30, 1
        %s176 = scalar_lea.sflag [#allocation3], %s175
        %s177 = sand.u32 %s30, 1
        %s178 = smul.addr %s177, 8
        %s179 = scalar_lea.vmem [#allocation2], %s178
        %p180 = pneg %p43
        %p181 = pneg %p40
        %s182 = sand.u32 %s56, 1
        %s183 = scalar_lea.sflag [#allocation6], %s182
        %s184 = sand.u32 %s56, 1
        %s185 = smul.addr %s184, 8
        %s186 = scalar_lea.vmem [#allocation5], %s185
        %p187 = pneg %p69
        %p188 = pneg %p66
        %p189 = pneg %p95
        %p190 = pneg %p92
        %s191 = sand.u32 %s82, 1
        %s192 = scalar_lea.sflag [#allocation4], %s191
        %s193 = sand.u32 %s82, 1
        %s194 = smul.addr %s193, 8
        %s195 = scalar_lea.vmem [#allocation7], %s194
        %v196 = vld [vmem:[%s161] sm:$0xff]
        %v197 = vld [vmem:[%s170] sm:$0xff]
        %v198 = vand.u32 2147483647, %v196
        %v199 = vsub.f32 0.0, %v198
        %v200 = vmul.f32 %v199, 1.442695
        %v201 = vpow.pop %v200
        %v202 = vmax.f32 %v196, 0.0
        %v203 = vmul.f32 %v196, %v197
        %v204 = vsub.f32 %v202, %v203
        %v205 = vadd.f32 %v201, 1.0
        %v206 = vlog2.pop %v205
        %v207 = vmul.f32 %v206, 0.6931472
        %v208 = vmul.f32 -0.5, %v201
        %v209 = vadd.f32 %v208, 1.0
        %v210 = vmul.f32 %v209, %v201
        %v211 = vand.u32 2147483647, %v201
        %vm212 = vcmp.lt.f32.partialorder %v211, 0.0004427343
        %v213 = vsel %vm212, %v210, %v207
        %v214 = vadd.f32 %v204, %v213
        %v215 = vadd.f32 %v201, 1.0
        %v216 = vrcp.pop %v215
        %v217 = vmul.f32 1.0, %v216
        %vm218 = vcmp.ge.f32.partialorder %v196, 0.0
        %v219 = vmul.f32 %v201, %v217
        %v220 = vsel %vm218, %v217, %v219
        %v221 = vmul.f32 %v197, %v220
        %v222 = vsub.f32 1.0, %v197
        %v223 = vsub.f32 1.0, %v220
        %v224 = vmul.f32 %v222, %v223
        %v225 = vadd.f32 %v221, %v224
        %v226 = vmul.f32 %v197, 0.25
        %v227 = vmul.f32 %v222, 0.75
        %v228 = vadd.f32 %v226, %v227
        %v229 = vsub.f32 1.0, %v225
        %v230 = vmax.f32 %v229, 0.0
        %v231 = vmul.f32 %v214, %v228
        %v232 = vrsqrt.pop %v230
        %v233 = vmul.f32 %v230, %v232
        %vm234 = vcmp.eq.f32.partialorder %v230, inf
        %v235 = vsel %vm234, %v230, %v233
        %vm236 = vcmp.eq.f32.partialorder %v230, 0.0
        %v237 = vand.u32 %v230, 2147483648
        %v238 = vsel %vm236, %v237, %v235
        %v239 = vmul.f32 %v230, %v238
        %v240 = vmul.f32 %v231, %v239
        %v241 = vadd.f32 %v240, 0.0
        %242 = vst [vmem:[%s195] sm:$0xff] %v241
        %s243 = sand.u32 %s82, 1
        %s244 = scalar_lea.sflag [#allocation4], %s243
        %s245 = sand.u32 %s82, 1
        %s246 = smul.addr %s245, 8
        %s247 = scalar_lea.vmem [#allocation7], %s246
        // Predicated region
        $region37: #{tpu_custom_call.1} parent=27 // pred_check
          %p248 = pneg %p92
        $region38: #{tpu_custom_call.1} parent=27 // pred_check_branch
          %250 = sbr.rel (%p248) target = $region40
        $region39: #{tpu_custom_call.1} parent=27 // pred_region
          %s252 = ssub.s32 128, 128
          %253 = vsyncadd %s244, %s252
          %s254 = smul.addr %s22, 128
          %s255 = scalar_lea.hbm %s2, %s254
          %s257 = sshll.u32 %s247, 4
          %s258 = int_to_ptr.vmem [resolvable:$true] %s257
          %260 = dma.vmem_to_hbm [thread:$0]  %s258, 128, %s255, %s244
        $region40: #{tpu_custom_call.1} parent=27 // pred_fallthru
          _
      $region28: #{tpu_custom_call.1} parent=5 // pred_fallthru
        _
      %p261 = scmp.le.s32.totalorder 2, %s17
      // Predicated region
      $region41: #{tpu_custom_call.1} parent=5 // pred_check
        %p262 = pneg %p261
      $region42: #{tpu_custom_call.1} parent=5 // pred_check_branch
        %264 = sbr.rel (%p262) target = $region44
      $region43: #{tpu_custom_call.1} parent=5 // pred_region
        %s265 = ssub.s32 %s17, 2
        // Predicated region
        $region45: #{tpu_custom_call.1} parent=43 // pred_check
          %p266 = pneg %p98
        $region46: #{tpu_custom_call.1} parent=43 // pred_check_branch
          %268 = sbr.rel (%p266) target = $region48
        $region47: #{tpu_custom_call.1} parent=43 // pred_region
          %s269 = sand.u32 %s83, 1
          %s270 = scalar_lea.sflag [#allocation4], %s269
          %s271 = sand.u32 %s83, 1
          %s272 = smul.addr %s271, 8
          %s273 = scalar_lea.vmem [#allocation7], %s272
          %274 = dma.done %s270, 128
        $region48: #{tpu_custom_call.1} parent=43 // pred_fallthru
          _
      $region44: #{tpu_custom_call.1} parent=5 // pred_fallthru
        _
    $region6: #{tpu_custom_call.1} parent=1 // loop_footer
      %s21 = sadd.s32 1, %s17
    $region7: #{tpu_custom_call.1} parent=1 // loop_footer_branch
      %16 = sbr.rel target = $region3
    $region8: #{tpu_custom_call.1} parent=1 // loop_exit
      _
    %275 = vsyncpa [#allocation3], 1
    %s276 = scalar_lea.sflag [#allocation3], 1
    %277 = vsyncpa %s276, 1
    %278 = vsyncpa [#allocation6], 1
    %s279 = scalar_lea.sflag [#allocation6], 1
    %280 = vsyncpa %s279, 1
    %281 = vsyncpa [#allocation4], 1
    %s282 = scalar_lea.sflag [#allocation4], 1
    %283 = vsyncpa %s282, 1

</llo_original>
